<compile_context>
chip_gen: v7x
topology: tpu7x:2x2x1
jax: 0.10.0
libtpu: 0.0.40
codegen_flags: <defaults>
</compile_context>

<pallas_src>
import functools

import jax
import jax.numpy as jnp
from jax.experimental import pallas as pl
from jax.experimental.pallas import tpu as pltpu


_NC = 4  # coefficient columns: [1, h_c, w_c, h_c^2 + w_c^2]


def _moments_kernel(a_ref, coef_ref, m_ref, *, precision):
    """One MXU matmul per block: (tile_rows, S) @ (S, 4) -> (tile_rows, 4) f32."""
    m_ref[...] = jnp.dot(
        a_ref[...], coef_ref[...],
        precision=precision,
        preferred_element_type=jnp.float32,
    )


def _coef_matrix(H, W, dtype):
    """(S, 4) matrix with columns [1, h_c, w_c, h_c^2 + w_c^2], s = h*W + w."""
    ch, cw = (H - 1) / 2.0, (W - 1) / 2.0
    h = jnp.arange(H, dtype=jnp.float32) - ch
    w = jnp.arange(W, dtype=jnp.float32) - cw
    hg = jnp.repeat(h, W)          # h index of s = s // W
    wg = jnp.tile(w, H)            # w index of s = s %  W
    coef = jnp.stack([jnp.ones_like(hg), hg, wg, hg * hg + wg * wg], axis=1)
    # bf16 models get bf16 coefficients (single-pass MXU); centred h/w (and
    # h^2+w^2 for H,W <= ~16) are exactly representable — tiny bias beyond that.
    return coef.astype(dtype)


@functools.partial(jax.jit, static_argnames=("weight", "tile_rows"))
def att_distribute_loss(A_, length, *, weight=1.0, tile_rows=None):
    """Pallas forward of att_distribute_loss. Returns a scalar f32."""
    N, T, P, H, W = A_.shape
    S = H * W
    R = N * T * P
    itemsize = jnp.dtype(A_.dtype).itemsize

    # Rows = flattened (n, t, p), columns = flattened spatial index h*W + w.
    # Row-major reshape is free (no copy); no dtype cast, no row padding.
    A2 = A_.reshape(R, S)
    coef = _coef_matrix(H, W, A_.dtype)

    # ---- tile sizing: large blocks, >= ~4 grid steps, per-generation VMEM ----
    try:
        vmem_cap = pltpu.get_tpu_info().vmem_capacity_bytes
    except Exception:
        vmem_cap = 64 * 1024 * 1024
    if vmem_cap >= 96 * 1024 * 1024:          # v5e / v6e: 128 MiB VMEM
        target_block, vmem_limit = 16 << 20, 64 << 20
    else:                                      # v7x: 64 MiB per TensorCore
        target_block, vmem_limit = 8 << 20, 32 << 20

    if tile_rows is None:
        by_bytes = max(8, (target_block // max(S * itemsize, 1)) // 8 * 8)
        row_chunks = pl.cdiv(R, 8)
        steps_target = min(4, row_chunks)      # >=2 steps when possible: 2 TCs + overlap
        by_steps = 8 * max(1, pl.cdiv(row_chunks, steps_target))
        tile_rows = min(by_bytes, by_steps)
    tile_rows = max(8, int(tile_rows) // 8 * 8)

    grid = (pl.cdiv(R, tile_rows),)            # partial last block handled by Pallas

    precision = (jax.lax.Precision.HIGHEST
                 if A2.dtype == jnp.float32 else None)

    moments = pl.pallas_call(
        functools.partial(_moments_kernel, precision=precision),
        out_shape=jax.ShapeDtypeStruct((R, _NC), jnp.float32),
        grid=grid,
        in_specs=[
            pl.BlockSpec((tile_rows, S), lambda i: (i, 0)),
            pl.BlockSpec((S, _NC), lambda i: (0, 0)),   # constant block: fetched once
        ],
        out_specs=pl.BlockSpec((tile_rows, _NC), lambda i: (i, 0)),
        compiler_params=pltpu.CompilerParams(
            dimension_semantics=("parallel",),
            vmem_limit_bytes=vmem_limit,
        ),
    )(A2, coef)

    # ---- O(R) epilogue in plain XLA (lane-parallel for free, tiny traffic) ---
    ch, cw = (H - 1) / 2.0, (W - 1) / 2.0
    s0 = moments[:, 0]                      # sum A
    s1 = moments[:, 1]                      # sum A * h_c
    s2 = moments[:, 2]                      # sum A * w_c
    s3 = moments[:, 3]                      # sum A * (h_c^2 + w_c^2)
    d = s0 + 9e-07
    mh = (s1 - ch * 9e-07) / d              # == torch mean_h - ch, exactly
    mw = (s2 - cw * 9e-07) / d
    spread = s3 - 2.0 * (mh * s1 + mw * s2) + (mh * mh + mw * mw) * s0
    div = spread / jnp.maximum(s0, 9e-06)   # per-(n, t, p) div_loss

    # Masked mean over valid (n, t) entries x P parts (replaces neko_inflater).
    valid = jnp.arange(T)[None, :] < length[:, None]           # (N, T)
    mask = jnp.repeat(valid.reshape(-1), P)                     # (R,)
    num = jnp.sum(jnp.where(mask, div, 0.0))
    den = jnp.sum(mask.astype(jnp.float32))
    return num / den / max(W, H) * weight


def _reference(A_, length, weight):
    """Pure-JAX reference mirroring the PyTorch forward (masked, two-pass)."""
    N, T, P, H, W = A_.shape
    A = A_.astype(jnp.float32)
    hh = jnp.broadcast_to(jnp.arange(H, dtype=jnp.float32)[:, None], (H, W))
    ww = jnp.broadcast_to(jnp.arange(W, dtype=jnp.float32)[None, :], (H, W))
    asum = A.sum(axis=(-2, -1))                                           # (N,T,P)
    mh = (A * hh).sum(axis=(-2, -1)) / (asum + 9e-07)
    mw = (A * ww).sum(axis=(-2, -1)) / (asum + 9e-07)
    dist = (hh[None, None, None] - mh[..., None, None]) ** 2 \
         + (ww[None, None, None] - mw[..., None, None]) ** 2
    div = (A * dist).sum(axis=(-2, -1)) / jnp.maximum(asum, 9e-06)        # (N,T,P)
    mask = (jnp.arange(T)[None, :] < length[:, None]).astype(jnp.float32)  # (N,T)
    num = (div * mask[..., None]).sum()
    den = mask.sum() * P
    return num / den / max(W, H) * weight


if __name__ == "__main__":
    # Small, module-consistent shapes: N=2, T=8, P=4, H=W=16.
    key = jax.random.PRNGKey(0)
    N, T, P, H, W = 2, 8, 4, 16, 16
    length = jnp.array([8, 5], dtype=jnp.int32)
    weight = 0.5

    # 1) Uniform-random attention maps.
    A_u = jax.random.uniform(key, (N, T, P, H, W), dtype=jnp.float32)
    out = jax.block_until_ready(att_distribute_loss(A_u, length, weight=weight))
    ref = jax.block_until_ready(_reference(A_u, length, weight))
    assert jnp.allclose(out, ref, rtol=1e-5, atol=1e-5), (out, ref)

    # 2) Near-delta attention maps: stresses the one-pass moment cancellation
    #    path flagged in the review (centred coords + f32/HIGHEST keep it tight).
    k1, k2 = jax.random.split(key)
    pos = jax.random.randint(k1, (N, T, P), 0, H * W)
    onehot = jax.nn.one_hot(pos, H * W, dtype=jnp.float32).reshape(N, T, P, H, W)
    A_p = onehot + 1e-3 * jax.random.uniform(k2, (N, T, P, H, W), dtype=jnp.float32)
    out_p = jax.block_until_ready(att_distribute_loss(A_p, length, weight=weight))
    ref_p = jax.block_until_ready(_reference(A_p, length, weight))
    assert jnp.allclose(out_p, ref_p, rtol=1e-3, atol=1e-4), (out_p, ref_p)

    print("KERNEL_OK")
</pallas_src>

<mosaic_0001>
module attributes {stable_mosaic.version = 11 : i64} {
  func.func @_moments_kernel(%arg0: i32, %arg1: memref<16x256xf32, #tpu.memory_space<vmem>>, %arg2: memref<256x4xf32, #tpu.memory_space<vmem>>, %arg3: memref<16x4xf32, #tpu.memory_space<vmem>>) attributes {dimension_semantics = [#tpu.dimension_semantics<parallel>], iteration_bounds = array<i64: 4>, scalar_prefetch = 0 : i64, scratch_operands = 0 : i64, tpu.core_type = #tpu.core_type<tc>, window_params = [{transform_indices = @transform_0, window_bounds = array<i64: 16, 256>}, {pipeline_mode = #tpu.pipeline_mode<synchronous>, transform_indices = @transform_1, window_bounds = array<i64: 256, 4>}, {transform_indices = @transform_2, window_bounds = array<i64: 16, 4>}]} {
    %c0 = arith.constant 0 : index
    %c0_0 = arith.constant 0 : index
    %0 = vector.load %arg1[%c0, %c0_0] : memref<16x256xf32, #tpu.memory_space<vmem>>, vector<16x256xf32>
    %c0_1 = arith.constant 0 : index
    %c0_2 = arith.constant 0 : index
    %1 = vector.load %arg2[%c0_1, %c0_2] : memref<256x4xf32, #tpu.memory_space<vmem>>, vector<256x4xf32>
    %cst = arith.constant dense<0.000000e+00> : vector<16x4xf32>
    %2 = tpu.matmul %0, %1, %cst {dimension_numbers = #tpu.dot_dimension_numbers<[1], [0], [0], [1], [0, 0, 1, 1], [], []>, precision = #tpu.contract_precision<fp32>} : vector<16x256xf32>, vector<256x4xf32>, vector<16x4xf32> -> vector<16x4xf32>
    %c0_3 = arith.constant 0 : index
    %c0_4 = arith.constant 0 : index
    %3 = vector.load %arg3[%c0_3, %c0_4] : memref<16x4xf32, #tpu.memory_space<vmem>>, vector<16x4xf32>
    tpu.vector_store %arg3[%c0_3, %c0_4], %2 {strides = array<i32>} : memref<16x4xf32, #tpu.memory_space<vmem>>, vector<16x4xf32>,
    return
  }
  func.func @transform_0(%arg0: i32) -> (i32, i32) {
    %c0_i32 = arith.constant 0 : i32
    %c0_i32_0 = arith.constant 0 : i32
    return %arg0, %c0_i32 : i32, i32
  }
  func.func @transform_1(%arg0: i32) -> (i32, i32) {
    %c0_i32 = arith.constant 0 : i32
    %c0_i32_0 = arith.constant 0 : i32
    %c0_i32_1 = arith.constant 0 : i32
    return %c0_i32, %c0_i32_0 : i32, i32
  }
  func.func @transform_2(%arg0: i32) -> (i32, i32) {
    %c0_i32 = arith.constant 0 : i32
    %c0_i32_0 = arith.constant 0 : i32
    return %arg0, %c0_i32 : i32, i32
  }
}

</mosaic_0001>

<llo_original>
// kernel: tile.9
$region0: #{tile.9}
  #allocation0 [shape = 's32[1]{0}', space=sflag, size = 0x4, scoped, tag = 'scoped memory for tile.9']
  %s0 = inlined_call_operand.vmem [shape: f32[16], index: 0, kind: input, shape index: {}]
  %s1 = inlined_call_operand.vmem [shape: f32[16,16], index: 1, kind: output, shape index: {}]
  // Predicated region
  $region2: #{tile.9} parent=0 // pred_check
    _
  $region3: #{tile.9} parent=0 // pred_check_branch
    %3 = sbr.rel (0) target = $region5
  $region4: #{tile.9} parent=0 // pred_region
    _
  $region5: #{tile.9} parent=0 // pred_fallthru
    _
  %v4 = vld [vmem:[%s0] ss:$0 sm:$0xff]
  %5 = vst [vmem:[%s1] sm:$0xff] %v4
  %s6 = scalar_lea.vmem %s1, 8
  %7 = vst [vmem:[%s6] sm:$0xff] %v4

// kernel: att_distribute_loss.1
$region0: #{att_distribute_loss.1}
  #allocation0 [shape = 'u32[]', space=smem, size = 0x4, offset = 0x4, fixed_abs, tag = 'smem constant byte address 0x4 - core index']
  #allocation1 [shape = 'u32[144,128]{1,0:T(1,128)}', space=vmem, size = 0x12000, scoped, tag = 'internal scratch']
  %s0 = inlined_call_operand.vmem [shape: f32[64,256], index: 0, kind: input, shape index: {}]
  %s1 = inlined_call_operand.vmem [shape: f32[256,4], index: 1, kind: input, shape index: {}]
  %s2 = inlined_call_operand.vmem [shape: f32[64,4], index: 2, kind: output, shape index: {}]
  %s3 = sld [smem:[#allocation0]]
  $region41: #{att_distribute_loss.1} parent=0
    _
  %s5 = ssub.s32 1, %s3
  %s6 = scalar_select 0, %s5, %s3
  loop: start=0, step=1, limit=6
  $region2: #{att_distribute_loss.1} parent=0 // loop_pre_header
    _
  $region3: #{att_distribute_loss.1} parent=0 // loop_header
    %s8 = sphi 0, %s12
    %p9 = scmp.ge.s32.totalorder %s8, 6
    %s18 = sphi 0, %s20
    %s21 = sphi 0, %s18
    %s22 = sphi 0, %s21
    %s38 = sphi 0, %s22
    %s42 = sphi 0, %s42
    %s44 = sphi 0, %s42
    %s45 = sphi 0, %s44
    %s59 = sphi 0, %s45
    %s65 = sphi 0, %s67
    %s68 = sphi 0, %s65
    %s69 = sphi 0, %s68
    %s85 = sphi 0, %s69
  $region4: #{att_distribute_loss.1} parent=0 // loop_header_branch
    %11 = sbr.rel (%p9) target = $region8
  $region5: #{att_distribute_loss.1} parent=0 // loop_body
    %s13 = ssub.s32 %s8, 1
    %s14 = ssub.s32 %s8, 2
    %s15 = sadd.s32 %s8, 1
    %s16 = ssub.s32 %s8, %s15
    %p17 = scmp.eq.s32.totalorder %s16, 0
    %s19 = sadd.s32 %s18, 1
    %s20 = scalar_select %p17, %s18, %s19
    %p23 = pneg %p17
    %p24 = scmp.eq.s32.totalorder %s8, 3
    %p25 = por %p23, %p24
    %p26 = scmp.ne.s32.totalorder %s18, %s21
    %p27 = scmp.eq.s32.totalorder %s8, 0
    %p28 = por %p26, %p27
    %p29 = scmp.ne.s32.totalorder %s18, %s21
    %p30 = scmp.eq.s32.totalorder %s13, 3
    %p31 = por %p29, %p30
    %p32 = scmp.ne.s32.totalorder %s21, %s22
    %p33 = scmp.eq.s32.totalorder %s13, 0
    %p34 = por %p32, %p33
    %p35 = scmp.ne.s32.totalorder %s21, %s22
    %p36 = scmp.eq.s32.totalorder %s14, 3
    %p37 = por %p35, %p36
    %p39 = scmp.ne.s32.totalorder %s22, %s38
    %p40 = scmp.eq.s32.totalorder %s14, 0
    %p41 = por %p39, %p40
    %s43 = sadd.s32 %s42, 1
    %p46 = scmp.eq.s32.totalorder %s8, 3
    %p47 = scmp.ne.s32.totalorder %s42, %s44
    %p48 = scmp.eq.s32.totalorder %s8, 0
    %p49 = por %p47, %p48
    %p50 = scmp.ne.s32.totalorder %s42, %s44
    %p51 = scmp.eq.s32.totalorder %s13, 3
    %p52 = por %p50, %p51
    %p53 = scmp.ne.s32.totalorder %s44, %s45
    %p54 = scmp.eq.s32.totalorder %s13, 0
    %p55 = por %p53, %p54
    %p56 = scmp.ne.s32.totalorder %s44, %s45
    %p57 = scmp.eq.s32.totalorder %s14, 3
    %p58 = por %p56, %p57
    %p60 = scmp.ne.s32.totalorder %s45, %s59
    %p61 = scmp.eq.s32.totalorder %s14, 0
    %p62 = por %p60, %p61
    %s63 = ssub.s32 %s8, %s15
    %p64 = scmp.eq.s32.totalorder %s63, 0
    %s66 = sadd.s32 %s65, 1
    %s67 = scalar_select %p64, %s65, %s66
    %p70 = pneg %p64
    %p71 = scmp.eq.s32.totalorder %s8, 3
    %p72 = por %p70, %p71
    %p73 = scmp.ne.s32.totalorder %s65, %s68
    %p74 = scmp.eq.s32.totalorder %s8, 0
    %p75 = por %p73, %p74
    %p76 = scmp.ne.s32.totalorder %s65, %s68
    %p77 = scmp.eq.s32.totalorder %s13, 3
    %p78 = por %p76, %p77
    %p79 = scmp.ne.s32.totalorder %s68, %s69
    %p80 = scmp.eq.s32.totalorder %s13, 0
    %p81 = por %p79, %p80
    %p82 = scmp.ne.s32.totalorder %s68, %s69
    %p83 = scmp.eq.s32.totalorder %s14, 3
    %p84 = por %p82, %p83
    %p86 = scmp.ne.s32.totalorder %s69, %s85
    %p87 = scmp.eq.s32.totalorder %s14, 0
    %p88 = por %p86, %p87
    %p89 = scmp.le.s32.totalorder 1, %s8
    %p90 = scmp.lt.s32.totalorder %s8, 5
    %p91 = pnand %p89, %p90
    %p92 = pneg %p91
    // Predicated region
    $region9: #{att_distribute_loss.1} parent=5 // pred_check
      _
    $region10: #{att_distribute_loss.1} parent=5 // pred_check_branch
      %94 = sbr.rel (%p91) target = $region12
    $region11: #{att_distribute_loss.1} parent=5 // pred_region
      %s95 = ssub.s32 %s8, 1
      // Predicated region
      $region13: #{att_distribute_loss.1} parent=11 // pred_check
        %p96 = pneg %p55
      $region14: #{att_distribute_loss.1} parent=11 // pred_check_branch
        %98 = sbr.rel (%p96) target = $region16
      $region15: #{att_distribute_loss.1} parent=11 // pred_region
        _
      $region16: #{att_distribute_loss.1} parent=11 // pred_fallthru
        _
    $region12: #{att_distribute_loss.1} parent=5 // pred_fallthru
      _
    %p99 = scmp.lt.s32.totalorder %s8, 4
    // Predicated region
    $region17: #{att_distribute_loss.1} parent=5 // pred_check
      %p100 = pneg %p99
    $region18: #{att_distribute_loss.1} parent=5 // pred_check_branch
      %102 = sbr.rel (%p100) target = $region20
    $region19: #{att_distribute_loss.1} parent=5 // pred_region
      // Predicated region
      $region21: #{att_distribute_loss.1} parent=19 // pred_check
        %p103 = pneg %p28
      $region22: #{att_distribute_loss.1} parent=19 // pred_check_branch
        %105 = sbr.rel (%p103) target = $region24
      $region23: #{att_distribute_loss.1} parent=19 // pred_region
        %s106 = smul.u32 2, %s8
        %p107 = scmp.lt.s32.totalorder %s106, 7
        %s108 = scalar_select %p107, %s106, 7
        %s109 = smul.addr %s108, 2
        %s110 = smul.addr %s109, 8
        %s111 = scalar_lea.vmem %s0, %s110
        %s112 = smul.u32 2, %s8
      $region24: #{att_distribute_loss.1} parent=19 // pred_fallthru
        _
    $region20: #{att_distribute_loss.1} parent=5 // pred_fallthru
      _
    %p113 = scmp.le.s32.totalorder 1, %s8
    %p114 = scmp.lt.s32.totalorder %s8, 5
    %p115 = pnand %p113, %p114
    %p116 = pneg %p115
    // Predicated region
    $region25: #{att_distribute_loss.1} parent=5 // pred_check
      _
    $region26: #{att_distribute_loss.1} parent=5 // pred_check_branch
      %118 = sbr.rel (%p115) target = $region28
    $region27: #{att_distribute_loss.1} parent=5 // pred_region
      %s119 = ssub.s32 %s8, 1
      %s120 = smul.u32 2, %s13
      %p121 = scmp.lt.s32.totalorder %s120, 7
      %s122 = scalar_select %p121, %s120, 7
      %s123 = smul.addr %s122, 2
      %s124 = smul.addr %s123, 8
      %s125 = scalar_lea.vmem %s0, %s124
      %p126 = pneg %p34
      %p127 = pneg %p31
      %p128 = pneg %p55
      %p129 = pneg %p52
      %p130 = pneg %p81
      %p131 = pneg %p78
      %s132 = smul.u32 2, %s13
      %p133 = scmp.lt.s32.totalorder %s132, 7
      %s134 = scalar_select %p133, %s132, 7
      %s135 = smul.addr %s134, 8
      %s136 = scalar_lea.vmem %s2, %s135
      %s137 = smul.u32 2, %s13
      %p138 = scmp.lt.s32.totalorder %s137, 7
      %s139 = scalar_select %p138, %s137, 7
      %s140 = smul.addr %s139, 2
      %s141 = smul.addr %s140, 8
      %s142 = scalar_lea.vmem %s0, %s141
      %s143 = smul.u32 2, %s13
      %s144 = smul.u32 2, %s13
      %p145 = scmp.lt.s32.totalorder %s144, 7
      %s146 = scalar_select %p145, %s144, 7
      %s147 = smul.addr %s146, 8
      %s148 = scalar_lea.vmem %s2, %s147
      %s149 = smul.u32 2, %s13
      %v150 = vld [vmem:[%s142] sm:$0xff]
      %v151 = vld [vmem:[%s142 + $0x8] sm:$0xff]
      %v152 = vld [vmem:[%s142 + $0x10] sm:$0xff]
      %v153 = vld [vmem:[%s142 + $0x18] sm:$0xff]
      %v154 = vld [vmem:[%s1] sm:$0xff]
      %v155 = vld [vmem:[%s1 + $0x8] sm:$0xff]
      %v156 = vld [vmem:[%s1 + $0x10] sm:$0xff]
      %v157 = vld [vmem:[%s1 + $0x18] sm:$0xff]
      %v158 = vld [vmem:[%s1 + $0x20] sm:$0xff]
      %v159 = vld [vmem:[%s1 + $0x28] sm:$0xff]
      %v160 = vld [vmem:[%s1 + $0x30] sm:$0xff]
      %v161 = vld [vmem:[%s1 + $0x38] sm:$0xff]
      %v162 = vld [vmem:[%s1 + $0x40] sm:$0xff]
      %v163 = vld [vmem:[%s1 + $0x48] sm:$0xff]
      %v164 = vld [vmem:[%s1 + $0x50] sm:$0xff]
      %v165 = vld [vmem:[%s1 + $0x58] sm:$0xff]
      %v166 = vld [vmem:[%s1 + $0x60] sm:$0xff]
      %v167 = vld [vmem:[%s1 + $0x68] sm:$0xff]
      %v168 = vld [vmem:[%s1 + $0x70] sm:$0xff]
      %v169 = vld [vmem:[%s1 + $0x78] sm:$0xff]
      %v170 = vld [vmem:[%s1 + $0x80] sm:$0xff]
      %v171 = vld [vmem:[%s1 + $0x88] sm:$0xff]
      %v172 = vld [vmem:[%s1 + $0x90] sm:$0xff]
      %v173 = vld [vmem:[%s1 + $0x98] sm:$0xff]
      %v174 = vld [vmem:[%s1 + $0xa0] sm:$0xff]
      %v175 = vld [vmem:[%s1 + $0xa8] sm:$0xff]
      %v176 = vld [vmem:[%s1 + $0xb0] sm:$0xff]
      %v177 = vld [vmem:[%s1 + $0xb8] sm:$0xff]
      %v178 = vld [vmem:[%s1 + $0xc0] sm:$0xff]
      %v179 = vld [vmem:[%s1 + $0xc8] sm:$0xff]
      %v180 = vld [vmem:[%s1 + $0xd0] sm:$0xff]
      %v181 = vld [vmem:[%s1 + $0xd8] sm:$0xff]
      %v182 = vld [vmem:[%s1 + $0xe0] sm:$0xff]
      %v183 = vld [vmem:[%s1 + $0xe8] sm:$0xff]
      %v184 = vld [vmem:[%s1 + $0xf0] sm:$0xff]
      %v185 = vld [vmem:[%s1 + $0xf8] sm:$0xff]
      %186 = vmatprep.subr.mxu0 0.0
      %v187 = vand.u32 %v154, 4294901760
      %188 = vmatpush1.msra.mxu0 %v187
      %189 = vmatprep.subr.mxu0 0.0
      %v190 = vand.u32 %v155, 4294901760
      %191 = vmatpush1.msra.mxu0 %v190
      %192 = vmatprep.subr.mxu0 0.0
      %v193 = vand.u32 %v156, 4294901760
      %194 = vmatpush1.msra.mxu0 %v193
      %195 = vmatprep.subr.mxu0 0.0
      %v196 = vand.u32 %v157, 4294901760
      %197 = vmatpush1.msra.mxu0 %v196
      %198 = vmatprep.subr.mxu0 0.0
      %v199 = vand.u32 %v158, 4294901760
      %200 = vmatpush1.msra.mxu0 %v199
      %201 = vmatprep.subr.mxu0 0.0
      %v202 = vand.u32 %v159, 4294901760
      %203 = vmatpush1.msra.mxu0 %v202
      %204 = vmatprep.subr.mxu0 0.0
      %v205 = vand.u32 %v160, 4294901760
      %206 = vmatpush1.msra.mxu0 %v205
      %207 = vmatprep.subr.mxu0 0.0
      %v208 = vand.u32 %v161, 4294901760
      %209 = vmatpush1.msra.mxu0 %v208
      %210 = vmatprep.subr.mxu0 0.0
      %v211 = vand.u32 %v162, 4294901760
      %212 = vmatpush1.msra.mxu0 %v211
      %213 = vmatprep.subr.mxu0 0.0
      %v214 = vand.u32 %v163, 4294901760
      %215 = vmatpush1.msra.mxu0 %v214
      %216 = vmatprep.subr.mxu0 0.0
      %v217 = vand.u32 %v164, 4294901760
      %218 = vmatpush1.msra.mxu0 %v217
      %219 = vmatprep.subr.mxu0 0.0
      %v220 = vand.u32 %v165, 4294901760
      %221 = vmatpush1.msra.mxu0 %v220
      %222 = vmatprep.subr.mxu0 0.0
      %v223 = vand.u32 %v166, 4294901760
      %224 = vmatpush1.msra.mxu0 %v223
      %225 = vmatprep.subr.mxu0 0.0
      %v226 = vand.u32 %v167, 4294901760
      %227 = vmatpush1.msra.mxu0 %v226
      %228 = vmatprep.subr.mxu0 0.0
      %v229 = vand.u32 %v168, 4294901760
      %230 = vmatpush1.msra.mxu0 %v229
      %231 = vmatprep.subr.mxu0 0.0
      %v232 = vand.u32 %v169, 4294901760
      %233 = vmatpush1.msra.mxu0 %v232
      %234 = vmatprep.subr.mxu0 0.0
      %v235 = vand.u32 %v170, 4294901760
      %236 = vmatpush1.msra.mxu0 %v235
      %237 = vmatprep.subr.mxu0 0.0
      %v238 = vand.u32 %v171, 4294901760
      %239 = vmatpush1.msra.mxu0 %v238
      %240 = vmatprep.subr.mxu0 0.0
      %v241 = vand.u32 %v172, 4294901760
      %242 = vmatpush1.msra.mxu0 %v241
      %243 = vmatprep.subr.mxu0 0.0
      %v244 = vand.u32 %v173, 4294901760
      %245 = vmatpush1.msra.mxu0 %v244
      %246 = vmatprep.subr.mxu0 0.0
      %v247 = vand.u32 %v174, 4294901760
      %248 = vmatpush1.msra.mxu0 %v247
      %249 = vmatprep.subr.mxu0 0.0
      %v250 = vand.u32 %v175, 4294901760
      %251 = vmatpush1.msra.mxu0 %v250
      %252 = vmatprep.subr.mxu0 0.0
      %v253 = vand.u32 %v176, 4294901760
      %254 = vmatpush1.msra.mxu0 %v253
      %255 = vmatprep.subr.mxu0 0.0
      %v256 = vand.u32 %v177, 4294901760
      %257 = vmatpush1.msra.mxu0 %v256
      %258 = vmatprep.subr.mxu0 0.0
      %v259 = vand.u32 %v178, 4294901760
      %260 = vmatpush1.msra.mxu0 %v259
      %261 = vmatprep.subr.mxu0 0.0
      %v262 = vand.u32 %v179, 4294901760
      %263 = vmatpush1.msra.mxu0 %v262
      %264 = vmatprep.subr.mxu0 0.0
      %v265 = vand.u32 %v180, 4294901760
      %266 = vmatpush1.msra.mxu0 %v265
      %267 = vmatprep.subr.mxu0 0.0
      %v268 = vand.u32 %v181, 4294901760
      %269 = vmatpush1.msra.mxu0 %v268
      %270 = vmatprep.subr.mxu0 0.0
      %v271 = vand.u32 %v182, 4294901760
      %272 = vmatpush1.msra.mxu0 %v271
      %273 = vmatprep.subr.mxu0 0.0
      %v274 = vand.u32 %v183, 4294901760
      %275 = vmatpush1.msra.mxu0 %v274
      %276 = vmatprep.subr.mxu0 0.0
      %v277 = vand.u32 %v184, 4294901760
      %278 = vmatpush1.msra.mxu0 %v277
      %279 = vmatprep.subr.mxu0 0.0
      %v280 = vand.u32 %v185, 4294901760
      %281 = vmatpush1.msra.mxu0 %v280
      %v282 = vand.u32 %v151, 4294901760
      %v283 = vsub.f32 %v151, %v282
      %v284 = vand.u32 %v283, 4294901760
      %v285 = vsub.f32 %v283, %v284
      %v286 = vand.u32 %v285, 4294901760
      %287 = vmatprep.mubr.f32.mxu0 %v286
      %v288 = vand.u32 %v150, 4294901760
      %v289 = vsub.f32 %v150, %v288
      %v290 = vand.u32 %v289, 4294901760
      %v291 = vsub.f32 %v289, %v290
      %v292 = vand.u32 %v291, 4294901760
      %293 = vmatmul.mubr.f32.gmra.mrb[0].mxu0 %v292
      %v294 = vpop.f32.mrb[0].mxu0
      %v295 = vadd.f32 0.0, %v294
      %v296 = vpop.f32.mrb[0].mxu0
      %v297 = vand.u32 %v153, 4294901760
      %v298 = vsub.f32 %v153, %v297
      %v299 = vand.u32 %v298, 4294901760
      %v300 = vsub.f32 %v298, %v299
      %v301 = vand.u32 %v300, 4294901760
      %302 = vmatprep.mubr.f32.mxu0 %v301
      %v303 = vand.u32 %v152, 4294901760
      %v304 = vsub.f32 %v152, %v303
      %v305 = vand.u32 %v304, 4294901760
      %v306 = vsub.f32 %v304, %v305
      %v307 = vand.u32 %v306, 4294901760
      %308 = vmatmul.mubr.f32.gmra.mrb[0].mxu0 %v307
      %v309 = vpop.f32.mrb[0].mxu0
      %v310 = vadd.f32 0.0, %v309
      %v311 = vpop.f32.mrb[0].mxu0
      %312 = vdwg.mxu0
      %313 = vmatprep.subr.mxu0 0.0
      %v314 = vand.u32 %v154, 4294901760
      %v315 = vsub.f32 %v154, %v314
      %v316 = vand.u32 %v315, 4294901760
      %v317 = vsub.f32 %v315, %v316
      %v318 = vand.u32 %v317, 4294901760
      %319 = vmatpush1.msra.mxu0 %v318
      %320 = vmatprep.subr.mxu0 0.0
      %v321 = vand.u32 %v155, 4294901760
      %v322 = vsub.f32 %v155, %v321
      %v323 = vand.u32 %v322, 4294901760
      %v324 = vsub.f32 %v322, %v323
      %v325 = vand.u32 %v324, 4294901760
      %326 = vmatpush1.msra.mxu0 %v325
      %327 = vmatprep.subr.mxu0 0.0
      %v328 = vand.u32 %v156, 4294901760
      %v329 = vsub.f32 %v156, %v328
      %v330 = vand.u32 %v329, 4294901760
      %v331 = vsub.f32 %v329, %v330
      %v332 = vand.u32 %v331, 4294901760
      %333 = vmatpush1.msra.mxu0 %v332
      %334 = vmatprep.subr.mxu0 0.0
      %v335 = vand.u32 %v157, 4294901760
      %v336 = vsub.f32 %v157, %v335
      %v337 = vand.u32 %v336, 4294901760
      %v338 = vsub.f32 %v336, %v337
      %v339 = vand.u32 %v338, 4294901760
      %340 = vmatpush1.msra.mxu0 %v339
      %341 = vmatprep.subr.mxu0 0.0
      %v342 = vand.u32 %v158, 4294901760
      %v343 = vsub.f32 %v158, %v342
      %v344 = vand.u32 %v343, 4294901760
      %v345 = vsub.f32 %v343, %v344
      %v346 = vand.u32 %v345, 4294901760
      %347 = vmatpush1.msra.mxu0 %v346
      %348 = vmatprep.subr.mxu0 0.0
      %v349 = vand.u32 %v159, 4294901760
      %v350 = vsub.f32 %v159, %v349
      %v351 = vand.u32 %v350, 4294901760
      %v352 = vsub.f32 %v350, %v351
      %v353 = vand.u32 %v352, 4294901760
      %354 = vmatpush1.msra.mxu0 %v353
      %355 = vmatprep.subr.mxu0 0.0
      %v356 = vand.u32 %v160, 4294901760
      %v357 = vsub.f32 %v160, %v356
      %v358 = vand.u32 %v357, 4294901760
      %v359 = vsub.f32 %v357, %v358
      %v360 = vand.u32 %v359, 4294901760
      %361 = vmatpush1.msra.mxu0 %v360
      %362 = vmatprep.subr.mxu0 0.0
      %v363 = vand.u32 %v161, 4294901760
      %v364 = vsub.f32 %v161, %v363
      %v365 = vand.u32 %v364, 4294901760
      %v366 = vsub.f32 %v364, %v365
      %v367 = vand.u32 %v366, 4294901760
      %368 = vmatpush1.msra.mxu0 %v367
      %369 = vmatprep.subr.mxu0 0.0
      %v370 = vand.u32 %v162, 4294901760
      %v371 = vsub.f32 %v162, %v370
      %v372 = vand.u32 %v371, 4294901760
      %v373 = vsub.f32 %v371, %v372
      %v374 = vand.u32 %v373, 4294901760
      %375 = vmatpush1.msra.mxu0 %v374
      %376 = vmatprep.subr.mxu0 0.0
      %v377 = vand.u32 %v163, 4294901760
      %v378 = vsub.f32 %v163, %v377
      %v379 = vand.u32 %v378, 4294901760
      %v380 = vsub.f32 %v378, %v379
      %v381 = vand.u32 %v380, 4294901760
      %382 = vmatpush1.msra.mxu0 %v381
      %383 = vmatprep.subr.mxu0 0.0
      %v384 = vand.u32 %v164, 4294901760
      %v385 = vsub.f32 %v164, %v384
      %v386 = vand.u32 %v385, 4294901760
      %v387 = vsub.f32 %v385, %v386
      %v388 = vand.u32 %v387, 4294901760
      %389 = vmatpush1.msra.mxu0 %v388
      %390 = vmatprep.subr.mxu0 0.0
      %v391 = vand.u32 %v165, 4294901760
      %v392 = vsub.f32 %v165, %v391
      %v393 = vand.u32 %v392, 4294901760
      %v394 = vsub.f32 %v392, %v393
      %v395 = vand.u32 %v394, 4294901760
      %396 = vmatpush1.msra.mxu0 %v395
      %397 = vmatprep.subr.mxu0 0.0
      %v398 = vand.u32 %v166, 4294901760
      %v399 = vsub.f32 %v166, %v398
      %v400 = vand.u32 %v399, 4294901760
      %v401 = vsub.f32 %v399, %v400
      %v402 = vand.u32 %v401, 4294901760
      %403 = vmatpush1.msra.mxu0 %v402
      %404 = vmatprep.subr.mxu0 0.0
      %v405 = vand.u32 %v167, 4294901760
      %v406 = vsub.f32 %v167, %v405
      %v407 = vand.u32 %v406, 4294901760
      %v408 = vsub.f32 %v406, %v407
      %v409 = vand.u32 %v408, 4294901760
      %410 = vmatpush1.msra.mxu0 %v409
      %411 = vmatprep.subr.mxu0 0.0
      %v412 = vand.u32 %v168, 4294901760
      %v413 = vsub.f32 %v168, %v412
      %v414 = vand.u32 %v413, 4294901760
      %v415 = vsub.f32 %v413, %v414
      %v416 = vand.u32 %v415, 4294901760
      %417 = vmatpush1.msra.mxu0 %v416
      %418 = vmatprep.subr.mxu0 0.0
      %v419 = vand.u32 %v169, 4294901760
      %v420 = vsub.f32 %v169, %v419
      %v421 = vand.u32 %v420, 4294901760
      %v422 = vsub.f32 %v420, %v421
      %v423 = vand.u32 %v422, 4294901760
      %424 = vmatpush1.msra.mxu0 %v423
      %425 = vmatprep.subr.mxu0 0.0
      %v426 = vand.u32 %v170, 4294901760
      %v427 = vsub.f32 %v170, %v426
      %v428 = vand.u32 %v427, 4294901760
      %v429 = vsub.f32 %v427, %v428
      %v430 = vand.u32 %v429, 4294901760
      %431 = vmatpush1.msra.mxu0 %v430
      %432 = vmatprep.subr.mxu0 0.0
      %v433 = vand.u32 %v171, 4294901760
      %v434 = vsub.f32 %v171, %v433
      %v435 = vand.u32 %v434, 4294901760
      %v436 = vsub.f32 %v434, %v435
      %v437 = vand.u32 %v436, 4294901760
      %438 = vmatpush1.msra.mxu0 %v437
      %439 = vmatprep.subr.mxu0 0.0
      %v440 = vand.u32 %v172, 4294901760
      %v441 = vsub.f32 %v172, %v440
      %v442 = vand.u32 %v441, 4294901760
      %v443 = vsub.f32 %v441, %v442
      %v444 = vand.u32 %v443, 4294901760
      %445 = vmatpush1.msra.mxu0 %v444
      %446 = vmatprep.subr.mxu0 0.0
      %v447 = vand.u32 %v173, 4294901760
      %v448 = vsub.f32 %v173, %v447
      %v449 = vand.u32 %v448, 4294901760
      %v450 = vsub.f32 %v448, %v449
      %v451 = vand.u32 %v450, 4294901760
      %452 = vmatpush1.msra.mxu0 %v451
      %453 = vmatprep.subr.mxu0 0.0
      %v454 = vand.u32 %v174, 4294901760
      %v455 = vsub.f32 %v174, %v454
      %v456 = vand.u32 %v455, 4294901760
      %v457 = vsub.f32 %v455, %v456
      %v458 = vand.u32 %v457, 4294901760
      %459 = vmatpush1.msra.mxu0 %v458
      %460 = vmatprep.subr.mxu0 0.0
      %v461 = vand.u32 %v175, 4294901760
      %v462 = vsub.f32 %v175, %v461
      %v463 = vand.u32 %v462, 4294901760
      %v464 = vsub.f32 %v462, %v463
      %v465 = vand.u32 %v464, 4294901760
      %466 = vmatpush1.msra.mxu0 %v465
      %467 = vmatprep.subr.mxu0 0.0
      %v468 = vand.u32 %v176, 4294901760
      %v469 = vsub.f32 %v176, %v468
      %v470 = vand.u32 %v469, 4294901760
      %v471 = vsub.f32 %v469, %v470
      %v472 = vand.u32 %v471, 4294901760
      %473 = vmatpush1.msra.mxu0 %v472
      %474 = vmatprep.subr.mxu0 0.0
      %v475 = vand.u32 %v177, 4294901760
      %v476 = vsub.f32 %v177, %v475
      %v477 = vand.u32 %v476, 4294901760
      %v478 = vsub.f32 %v476, %v477
      %v479 = vand.u32 %v478, 4294901760
      %480 = vmatpush1.msra.mxu0 %v479
      %481 = vmatprep.subr.mxu0 0.0
      %v482 = vand.u32 %v178, 4294901760
      %v483 = vsub.f32 %v178, %v482
      %v484 = vand.u32 %v483, 4294901760
      %v485 = vsub.f32 %v483, %v484
      %v486 = vand.u32 %v485, 4294901760
      %487 = vmatpush1.msra.mxu0 %v486
      %488 = vmatprep.subr.mxu0 0.0
      %v489 = vand.u32 %v179, 4294901760
      %v490 = vsub.f32 %v179, %v489
      %v491 = vand.u32 %v490, 4294901760
      %v492 = vsub.f32 %v490, %v491
      %v493 = vand.u32 %v492, 4294901760
      %494 = vmatpush1.msra.mxu0 %v493
      %495 = vmatprep.subr.mxu0 0.0
      %v496 = vand.u32 %v180, 4294901760
      %v497 = vsub.f32 %v180, %v496
      %v498 = vand.u32 %v497, 4294901760
      %v499 = vsub.f32 %v497, %v498
      %v500 = vand.u32 %v499, 4294901760
      %501 = vmatpush1.msra.mxu0 %v500
      %502 = vmatprep.subr.mxu0 0.0
      %v503 = vand.u32 %v181, 4294901760
      %v504 = vsub.f32 %v181, %v503
      %v505 = vand.u32 %v504, 4294901760
      %v506 = vsub.f32 %v504, %v505
      %v507 = vand.u32 %v506, 4294901760
      %508 = vmatpush1.msra.mxu0 %v507
      %509 = vmatprep.subr.mxu0 0.0
      %v510 = vand.u32 %v182, 4294901760
      %v511 = vsub.f32 %v182, %v510
      %v512 = vand.u32 %v511, 4294901760
      %v513 = vsub.f32 %v511, %v512
      %v514 = vand.u32 %v513, 4294901760
      %515 = vmatpush1.msra.mxu0 %v514
      %516 = vmatprep.subr.mxu0 0.0
      %v517 = vand.u32 %v183, 4294901760
      %v518 = vsub.f32 %v183, %v517
      %v519 = vand.u32 %v518, 4294901760
      %v520 = vsub.f32 %v518, %v519
      %v521 = vand.u32 %v520, 4294901760
      %522 = vmatpush1.msra.mxu0 %v521
      %523 = vmatprep.subr.mxu0 0.0
      %v524 = vand.u32 %v184, 4294901760
      %v525 = vsub.f32 %v184, %v524
      %v526 = vand.u32 %v525, 4294901760
      %v527 = vsub.f32 %v525, %v526
      %v528 = vand.u32 %v527, 4294901760
      %529 = vmatpush1.msra.mxu0 %v528
      %530 = vmatprep.subr.mxu0 0.0
      %v531 = vand.u32 %v185, 4294901760
      %v532 = vsub.f32 %v185, %v531
      %v533 = vand.u32 %v532, 4294901760
      %v534 = vsub.f32 %v532, %v533
      %v535 = vand.u32 %v534, 4294901760
      %536 = vmatpush1.msra.mxu0 %v535
      %v537 = vand.u32 %v151, 4294901760
      %538 = vmatprep.mubr.f32.mxu0 %v537
      %v539 = vand.u32 %v150, 4294901760
      %540 = vmatmul.mubr.f32.gmra.mrb[0].mxu0 %v539
      %v541 = vpop.f32.mrb[0].mxu0
      %v542 = vadd.f32 %v295, %v541
      %v543 = vpop.f32.mrb[0].mxu0
      %v544 = vand.u32 %v153, 4294901760
      %545 = vmatprep.mubr.f32.mxu0 %v544
      %v546 = vand.u32 %v152, 4294901760
      %547 = vmatmul.mubr.f32.gmra.mrb[0].mxu0 %v546
      %v548 = vpop.f32.mrb[0].mxu0
      %v549 = vadd.f32 %v310, %v548
      %v550 = vpop.f32.mrb[0].mxu0
      %551 = vdwg.mxu0
      %552 = vmatprep.subr.mxu0 0.0
      %v553 = vand.u32 %v154, 4294901760
      %v554 = vsub.f32 %v154, %v553
      %555 = vmatpush1.msra.mxu0 %v554
      %556 = vmatprep.subr.mxu0 0.0
      %v557 = vand.u32 %v155, 4294901760
      %v558 = vsub.f32 %v155, %v557
      %559 = vmatpush1.msra.mxu0 %v558
      %560 = vmatprep.subr.mxu0 0.0
      %v561 = vand.u32 %v156, 4294901760
      %v562 = vsub.f32 %v156, %v561
      %563 = vmatpush1.msra.mxu0 %v562
      %564 = vmatprep.subr.mxu0 0.0
      %v565 = vand.u32 %v157, 4294901760
      %v566 = vsub.f32 %v157, %v565
      %567 = vmatpush1.msra.mxu0 %v566
      %568 = vmatprep.subr.mxu0 0.0
      %v569 = vand.u32 %v158, 4294901760
      %v570 = vsub.f32 %v158, %v569
      %571 = vmatpush1.msra.mxu0 %v570
      %572 = vmatprep.subr.mxu0 0.0
      %v573 = vand.u32 %v159, 4294901760
      %v574 = vsub.f32 %v159, %v573
      %575 = vmatpush1.msra.mxu0 %v574
      %576 = vmatprep.subr.mxu0 0.0
      %v577 = vand.u32 %v160, 4294901760
      %v578 = vsub.f32 %v160, %v577
      %579 = vmatpush1.msra.mxu0 %v578
      %580 = vmatprep.subr.mxu0 0.0
      %v581 = vand.u32 %v161, 4294901760
      %v582 = vsub.f32 %v161, %v581
      %583 = vmatpush1.msra.mxu0 %v582
      %584 = vmatprep.subr.mxu0 0.0
      %v585 = vand.u32 %v162, 4294901760
      %v586 = vsub.f32 %v162, %v585
      %587 = vmatpush1.msra.mxu0 %v586
      %588 = vmatprep.subr.mxu0 0.0
      %v589 = vand.u32 %v163, 4294901760
      %v590 = vsub.f32 %v163, %v589
      %591 = vmatpush1.msra.mxu0 %v590
      %592 = vmatprep.subr.mxu0 0.0
      %v593 = vand.u32 %v164, 4294901760
      %v594 = vsub.f32 %v164, %v593
      %595 = vmatpush1.msra.mxu0 %v594
      %596 = vmatprep.subr.mxu0 0.0
      %v597 = vand.u32 %v165, 4294901760
      %v598 = vsub.f32 %v165, %v597
      %599 = vmatpush1.msra.mxu0 %v598
      %600 = vmatprep.subr.mxu0 0.0
      %v601 = vand.u32 %v166, 4294901760
      %v602 = vsub.f32 %v166, %v601
      %603 = vmatpush1.msra.mxu0 %v602
      %604 = vmatprep.subr.mxu0 0.0
      %v605 = vand.u32 %v167, 4294901760
      %v606 = vsub.f32 %v167, %v605
      %607 = vmatpush1.msra.mxu0 %v606
      %608 = vmatprep.subr.mxu0 0.0
      %v609 = vand.u32 %v168, 4294901760
      %v610 = vsub.f32 %v168, %v609
      %611 = vmatpush1.msra.mxu0 %v610
      %612 = vmatprep.subr.mxu0 0.0
      %v613 = vand.u32 %v169, 4294901760
      %v614 = vsub.f32 %v169, %v613
      %615 = vmatpush1.msra.mxu0 %v614
      %616 = vmatprep.subr.mxu0 0.0
      %v617 = vand.u32 %v170, 4294901760
      %v618 = vsub.f32 %v170, %v617
      %619 = vmatpush1.msra.mxu0 %v618
      %620 = vmatprep.subr.mxu0 0.0
      %v621 = vand.u32 %v171, 4294901760
      %v622 = vsub.f32 %v171, %v621
      %623 = vmatpush1.msra.mxu0 %v622
      %624 = vmatprep.subr.mxu0 0.0
      %v625 = vand.u32 %v172, 4294901760
      %v626 = vsub.f32 %v172, %v625
      %627 = vmatpush1.msra.mxu0 %v626
      %628 = vmatprep.subr.mxu0 0.0
      %v629 = vand.u32 %v173, 4294901760
      %v630 = vsub.f32 %v173, %v629
      %631 = vmatpush1.msra.mxu0 %v630
      %632 = vmatprep.subr.mxu0 0.0
      %v633 = vand.u32 %v174, 4294901760
      %v634 = vsub.f32 %v174, %v633
      %635 = vmatpush1.msra.mxu0 %v634
      %636 = vmatprep.subr.mxu0 0.0
      %v637 = vand.u32 %v175, 4294901760
      %v638 = vsub.f32 %v175, %v637
      %639 = vmatpush1.msra.mxu0 %v638
      %640 = vmatprep.subr.mxu0 0.0
      %v641 = vand.u32 %v176, 4294901760
      %v642 = vsub.f32 %v176, %v641
      %643 = vmatpush1.msra.mxu0 %v642
      %644 = vmatprep.subr.mxu0 0.0
      %v645 = vand.u32 %v177, 4294901760
      %v646 = vsub.f32 %v177, %v645
      %647 = vmatpush1.msra.mxu0 %v646
      %648 = vmatprep.subr.mxu0 0.0
      %v649 = vand.u32 %v178, 4294901760
      %v650 = vsub.f32 %v178, %v649
      %651 = vmatpush1.msra.mxu0 %v650
      %652 = vmatprep.subr.mxu0 0.0
      %v653 = vand.u32 %v179, 4294901760
      %v654 = vsub.f32 %v179, %v653
      %655 = vmatpush1.msra.mxu0 %v654
      %656 = vmatprep.subr.mxu0 0.0
      %v657 = vand.u32 %v180, 4294901760
      %v658 = vsub.f32 %v180, %v657
      %659 = vmatpush1.msra.mxu0 %v658
      %660 = vmatprep.subr.mxu0 0.0
      %v661 = vand.u32 %v181, 4294901760
      %v662 = vsub.f32 %v181, %v661
      %663 = vmatpush1.msra.mxu0 %v662
      %664 = vmatprep.subr.mxu0 0.0
      %v665 = vand.u32 %v182, 4294901760
      %v666 = vsub.f32 %v182, %v665
      %667 = vmatpush1.msra.mxu0 %v666
      %668 = vmatprep.subr.mxu0 0.0
      %v669 = vand.u32 %v183, 4294901760
      %v670 = vsub.f32 %v183, %v669
      %671 = vmatpush1.msra.mxu0 %v670
      %672 = vmatprep.subr.mxu0 0.0
      %v673 = vand.u32 %v184, 4294901760
      %v674 = vsub.f32 %v184, %v673
      %675 = vmatpush1.msra.mxu0 %v674
      %676 = vmatprep.subr.mxu0 0.0
      %v677 = vand.u32 %v185, 4294901760
      %v678 = vsub.f32 %v185, %v677
      %679 = vmatpush1.msra.mxu0 %v678
      %v680 = vand.u32 %v151, 4294901760
      %v681 = vsub.f32 %v151, %v680
      %682 = vmatprep.mubr.f32.mxu0 %v681
      %v683 = vand.u32 %v150, 4294901760
      %v684 = vsub.f32 %v150, %v683
      %685 = vmatmul.mubr.f32.gmra.mrb[0].mxu0 %v684
      %v686 = vpop.f32.mrb[0].mxu0
      %v687 = vadd.f32 %v542, %v686
      %v688 = vpop.f32.mrb[0].mxu0
      %v689 = vand.u32 %v153, 4294901760
      %v690 = vsub.f32 %v153, %v689
      %691 = vmatprep.mubr.f32.mxu0 %v690
      %v692 = vand.u32 %v152, 4294901760
      %v693 = vsub.f32 %v152, %v692
      %694 = vmatmul.mubr.f32.gmra.mrb[0].mxu0 %v693
      %v695 = vpop.f32.mrb[0].mxu0
      %v696 = vadd.f32 %v549, %v695
      %v697 = vpop.f32.mrb[0].mxu0
      %698 = vdwg.mxu0
      %699 = vmatprep.subr.mxu0 0.0
      %v700 = vand.u32 %v154, 4294901760
      %701 = vmatpush1.msra.mxu0 %v700
      %702 = vmatprep.subr.mxu0 0.0
      %v703 = vand.u32 %v155, 4294901760
      %704 = vmatpush1.msra.mxu0 %v703
      %705 = vmatprep.subr.mxu0 0.0
      %v706 = vand.u32 %v156, 4294901760
      %707 = vmatpush1.msra.mxu0 %v706
      %708 = vmatprep.subr.mxu0 0.0
      %v709 = vand.u32 %v157, 4294901760
      %710 = vmatpush1.msra.mxu0 %v709
      %711 = vmatprep.subr.mxu0 0.0
      %v712 = vand.u32 %v158, 4294901760
      %713 = vmatpush1.msra.mxu0 %v712
      %714 = vmatprep.subr.mxu0 0.0
      %v715 = vand.u32 %v159, 4294901760
      %716 = vmatpush1.msra.mxu0 %v715
      %717 = vmatprep.subr.mxu0 0.0
      %v718 = vand.u32 %v160, 4294901760
      %719 = vmatpush1.msra.mxu0 %v718
      %720 = vmatprep.subr.mxu0 0.0
      %v721 = vand.u32 %v161, 4294901760
      %722 = vmatpush1.msra.mxu0 %v721
      %723 = vmatprep.subr.mxu0 0.0
      %v724 = vand.u32 %v162, 4294901760
      %725 = vmatpush1.msra.mxu0 %v724
      %726 = vmatprep.subr.mxu0 0.0
      %v727 = vand.u32 %v163, 4294901760
      %728 = vmatpush1.msra.mxu0 %v727
      %729 = vmatprep.subr.mxu0 0.0
      %v730 = vand.u32 %v164, 4294901760
      %731 = vmatpush1.msra.mxu0 %v730
      %732 = vmatprep.subr.mxu0 0.0
      %v733 = vand.u32 %v165, 4294901760
      %734 = vmatpush1.msra.mxu0 %v733
      %735 = vmatprep.subr.mxu0 0.0
      %v736 = vand.u32 %v166, 4294901760
      %737 = vmatpush1.msra.mxu0 %v736
      %738 = vmatprep.subr.mxu0 0.0
      %v739 = vand.u32 %v167, 4294901760
      %740 = vmatpush1.msra.mxu0 %v739
      %741 = vmatprep.subr.mxu0 0.0
      %v742 = vand.u32 %v168, 4294901760
      %743 = vmatpush1.msra.mxu0 %v742
      %744 = vmatprep.subr.mxu0 0.0
      %v745 = vand.u32 %v169, 4294901760
      %746 = vmatpush1.msra.mxu0 %v745
      %747 = vmatprep.subr.mxu0 0.0
      %v748 = vand.u32 %v170, 4294901760
      %749 = vmatpush1.msra.mxu0 %v748
      %750 = vmatprep.subr.mxu0 0.0
      %v751 = vand.u32 %v171, 4294901760
      %752 = vmatpush1.msra.mxu0 %v751
      %753 = vmatprep.subr.mxu0 0.0
      %v754 = vand.u32 %v172, 4294901760
      %755 = vmatpush1.msra.mxu0 %v754
      %756 = vmatprep.subr.mxu0 0.0
      %v757 = vand.u32 %v173, 4294901760
      %758 = vmatpush1.msra.mxu0 %v757
      %759 = vmatprep.subr.mxu0 0.0
      %v760 = vand.u32 %v174, 4294901760
      %761 = vmatpush1.msra.mxu0 %v760
      %762 = vmatprep.subr.mxu0 0.0
      %v763 = vand.u32 %v175, 4294901760
      %764 = vmatpush1.msra.mxu0 %v763
      %765 = vmatprep.subr.mxu0 0.0
      %v766 = vand.u32 %v176, 4294901760
      %767 = vmatpush1.msra.mxu0 %v766
      %768 = vmatprep.subr.mxu0 0.0
      %v769 = vand.u32 %v177, 4294901760
      %770 = vmatpush1.msra.mxu0 %v769
      %771 = vmatprep.subr.mxu0 0.0
      %v772 = vand.u32 %v178, 4294901760
      %773 = vmatpush1.msra.mxu0 %v772
      %774 = vmatprep.subr.mxu0 0.0
      %v775 = vand.u32 %v179, 4294901760
      %776 = vmatpush1.msra.mxu0 %v775
      %777 = vmatprep.subr.mxu0 0.0
      %v778 = vand.u32 %v180, 4294901760
      %779 = vmatpush1.msra.mxu0 %v778
      %780 = vmatprep.subr.mxu0 0.0
      %v781 = vand.u32 %v181, 4294901760
      %782 = vmatpush1.msra.mxu0 %v781
      %783 = vmatprep.subr.mxu0 0.0
      %v784 = vand.u32 %v182, 4294901760
      %785 = vmatpush1.msra.mxu0 %v784
      %786 = vmatprep.subr.mxu0 0.0
      %v787 = vand.u32 %v183, 4294901760
      %788 = vmatpush1.msra.mxu0 %v787
      %789 = vmatprep.subr.mxu0 0.0
      %v790 = vand.u32 %v184, 4294901760
      %791 = vmatpush1.msra.mxu0 %v790
      %792 = vmatprep.subr.mxu0 0.0
      %v793 = vand.u32 %v185, 4294901760
      %794 = vmatpush1.msra.mxu0 %v793
      %v795 = vand.u32 %v151, 4294901760
      %v796 = vsub.f32 %v151, %v795
      %v797 = vand.u32 %v796, 4294901760
      %798 = vmatprep.mubr.f32.mxu0 %v797
      %v799 = vand.u32 %v150, 4294901760
      %v800 = vsub.f32 %v150, %v799
      %v801 = vand.u32 %v800, 4294901760
      %802 = vmatmul.mubr.f32.gmra.mrb[0].mxu0 %v801
      %v803 = vpop.f32.mrb[0].mxu0
      %v804 = vadd.f32 %v687, %v803
      %v805 = vpop.f32.mrb[0].mxu0
      %v806 = vand.u32 %v153, 4294901760
      %v807 = vsub.f32 %v153, %v806
      %v808 = vand.u32 %v807, 4294901760
      %809 = vmatprep.mubr.f32.mxu0 %v808
      %v810 = vand.u32 %v152, 4294901760
      %v811 = vsub.f32 %v152, %v810
      %v812 = vand.u32 %v811, 4294901760
      %813 = vmatmul.mubr.f32.gmra.mrb[0].mxu0 %v812
      %v814 = vpop.f32.mrb[0].mxu0
      %v815 = vadd.f32 %v696, %v814
      %v816 = vpop.f32.mrb[0].mxu0
      %817 = vdwg.mxu0
      %818 = vmatprep.subr.mxu0 0.0
      %v819 = vand.u32 %v154, 4294901760
      %v820 = vsub.f32 %v154, %v819
      %v821 = vand.u32 %v820, 4294901760
      %822 = vmatpush1.msra.mxu0 %v821
      %823 = vmatprep.subr.mxu0 0.0
      %v824 = vand.u32 %v155, 4294901760
      %v825 = vsub.f32 %v155, %v824
      %v826 = vand.u32 %v825, 4294901760
      %827 = vmatpush1.msra.mxu0 %v826
      %828 = vmatprep.subr.mxu0 0.0
      %v829 = vand.u32 %v156, 4294901760
      %v830 = vsub.f32 %v156, %v829
      %v831 = vand.u32 %v830, 4294901760
      %832 = vmatpush1.msra.mxu0 %v831
      %833 = vmatprep.subr.mxu0 0.0
      %v834 = vand.u32 %v157, 4294901760
      %v835 = vsub.f32 %v157, %v834
      %v836 = vand.u32 %v835, 4294901760
      %837 = vmatpush1.msra.mxu0 %v836
      %838 = vmatprep.subr.mxu0 0.0
      %v839 = vand.u32 %v158, 4294901760
      %v840 = vsub.f32 %v158, %v839
      %v841 = vand.u32 %v840, 4294901760
      %842 = vmatpush1.msra.mxu0 %v841
      %843 = vmatprep.subr.mxu0 0.0
      %v844 = vand.u32 %v159, 4294901760
      %v845 = vsub.f32 %v159, %v844
      %v846 = vand.u32 %v845, 4294901760
      %847 = vmatpush1.msra.mxu0 %v846
      %848 = vmatprep.subr.mxu0 0.0
      %v849 = vand.u32 %v160, 4294901760
      %v850 = vsub.f32 %v160, %v849
      %v851 = vand.u32 %v850, 4294901760
      %852 = vmatpush1.msra.mxu0 %v851
      %853 = vmatprep.subr.mxu0 0.0
      %v854 = vand.u32 %v161, 4294901760
      %v855 = vsub.f32 %v161, %v854
      %v856 = vand.u32 %v855, 4294901760
      %857 = vmatpush1.msra.mxu0 %v856
      %858 = vmatprep.subr.mxu0 0.0
      %v859 = vand.u32 %v162, 4294901760
      %v860 = vsub.f32 %v162, %v859
      %v861 = vand.u32 %v860, 4294901760
      %862 = vmatpush1.msra.mxu0 %v861
      %863 = vmatprep.subr.mxu0 0.0
      %v864 = vand.u32 %v163, 4294901760
      %v865 = vsub.f32 %v163, %v864
      %v866 = vand.u32 %v865, 4294901760
      %867 = vmatpush1.msra.mxu0 %v866
      %868 = vmatprep.subr.mxu0 0.0
      %v869 = vand.u32 %v164, 4294901760
      %v870 = vsub.f32 %v164, %v869
      %v871 = vand.u32 %v870, 4294901760
      %872 = vmatpush1.msra.mxu0 %v871
      %873 = vmatprep.subr.mxu0 0.0
      %v874 = vand.u32 %v165, 4294901760
      %v875 = vsub.f32 %v165, %v874
      %v876 = vand.u32 %v875, 4294901760
      %877 = vmatpush1.msra.mxu0 %v876
      %878 = vmatprep.subr.mxu0 0.0
      %v879 = vand.u32 %v166, 4294901760
      %v880 = vsub.f32 %v166, %v879
      %v881 = vand.u32 %v880, 4294901760
      %882 = vmatpush1.msra.mxu0 %v881
      %883 = vmatprep.subr.mxu0 0.0
      %v884 = vand.u32 %v167, 4294901760
      %v885 = vsub.f32 %v167, %v884
      %v886 = vand.u32 %v885, 4294901760
      %887 = vmatpush1.msra.mxu0 %v886
      %888 = vmatprep.subr.mxu0 0.0
      %v889 = vand.u32 %v168, 4294901760
      %v890 = vsub.f32 %v168, %v889
      %v891 = vand.u32 %v890, 4294901760
      %892 = vmatpush1.msra.mxu0 %v891
      %893 = vmatprep.subr.mxu0 0.0
      %v894 = vand.u32 %v169, 4294901760
      %v895 = vsub.f32 %v169, %v894
      %v896 = vand.u32 %v895, 4294901760
      %897 = vmatpush1.msra.mxu0 %v896
      %898 = vmatprep.subr.mxu0 0.0
      %v899 = vand.u32 %v170, 4294901760
      %v900 = vsub.f32 %v170, %v899
      %v901 = vand.u32 %v900, 4294901760
      %902 = vmatpush1.msra.mxu0 %v901
      %903 = vmatprep.subr.mxu0 0.0
      %v904 = vand.u32 %v171, 4294901760
      %v905 = vsub.f32 %v171, %v904
      %v906 = vand.u32 %v905, 4294901760
      %907 = vmatpush1.msra.mxu0 %v906
      %908 = vmatprep.subr.mxu0 0.0
      %v909 = vand.u32 %v172, 4294901760
      %v910 = vsub.f32 %v172, %v909
      %v911 = vand.u32 %v910, 4294901760
      %912 = vmatpush1.msra.mxu0 %v911
      %913 = vmatprep.subr.mxu0 0.0
      %v914 = vand.u32 %v173, 4294901760
      %v915 = vsub.f32 %v173, %v914
      %v916 = vand.u32 %v915, 4294901760
      %917 = vmatpush1.msra.mxu0 %v916
      %918 = vmatprep.subr.mxu0 0.0
      %v919 = vand.u32 %v174, 4294901760
      %v920 = vsub.f32 %v174, %v919
      %v921 = vand.u32 %v920, 4294901760
      %922 = vmatpush1.msra.mxu0 %v921
      %923 = vmatprep.subr.mxu0 0.0
      %v924 = vand.u32 %v175, 4294901760
      %v925 = vsub.f32 %v175, %v924
      %v926 = vand.u32 %v925, 4294901760
      %927 = vmatpush1.msra.mxu0 %v926
      %928 = vmatprep.subr.mxu0 0.0
      %v929 = vand.u32 %v176, 4294901760
      %v930 = vsub.f32 %v176, %v929
      %v931 = vand.u32 %v930, 4294901760
      %932 = vmatpush1.msra.mxu0 %v931
      %933 = vmatprep.subr.mxu0 0.0
      %v934 = vand.u32 %v177, 4294901760
      %v935 = vsub.f32 %v177, %v934
      %v936 = vand.u32 %v935, 4294901760
      %937 = vmatpush1.msra.mxu0 %v936
      %938 = vmatprep.subr.mxu0 0.0
      %v939 = vand.u32 %v178, 4294901760
      %v940 = vsub.f32 %v178, %v939
      %v941 = vand.u32 %v940, 4294901760
      %942 = vmatpush1.msra.mxu0 %v941
      %943 = vmatprep.subr.mxu0 0.0
      %v944 = vand.u32 %v179, 4294901760
      %v945 = vsub.f32 %v179, %v944
      %v946 = vand.u32 %v945, 4294901760
      %947 = vmatpush1.msra.mxu0 %v946
      %948 = vmatprep.subr.mxu0 0.0
      %v949 = vand.u32 %v180, 4294901760
      %v950 = vsub.f32 %v180, %v949
      %v951 = vand.u32 %v950, 4294901760
      %952 = vmatpush1.msra.mxu0 %v951
      %953 = vmatprep.subr.mxu0 0.0
      %v954 = vand.u32 %v181, 4294901760
      %v955 = vsub.f32 %v181, %v954
      %v956 = vand.u32 %v955, 4294901760
      %957 = vmatpush1.msra.mxu0 %v956
      %958 = vmatprep.subr.mxu0 0.0
      %v959 = vand.u32 %v182, 4294901760
      %v960 = vsub.f32 %v182, %v959
      %v961 = vand.u32 %v960, 4294901760
      %962 = vmatpush1.msra.mxu0 %v961
      %963 = vmatprep.subr.mxu0 0.0
      %v964 = vand.u32 %v183, 4294901760
      %v965 = vsub.f32 %v183, %v964
      %v966 = vand.u32 %v965, 4294901760
      %967 = vmatpush1.msra.mxu0 %v966
      %968 = vmatprep.subr.mxu0 0.0
      %v969 = vand.u32 %v184, 4294901760
      %v970 = vsub.f32 %v184, %v969
      %v971 = vand.u32 %v970, 4294901760
      %972 = vmatpush1.msra.mxu0 %v971
      %973 = vmatprep.subr.mxu0 0.0
      %v974 = vand.u32 %v185, 4294901760
      %v975 = vsub.f32 %v185, %v974
      %v976 = vand.u32 %v975, 4294901760
      %977 = vmatpush1.msra.mxu0 %v976
      %v978 = vand.u32 %v151, 4294901760
      %979 = vmatprep.mubr.f32.mxu0 %v978
      %v980 = vand.u32 %v150, 4294901760
      %981 = vmatmul.mubr.f32.gmra.mrb[0].mxu0 %v980
      %v982 = vpop.f32.mrb[0].mxu0
      %v983 = vadd.f32 %v804, %v982
      %v984 = vpop.f32.mrb[0].mxu0
      %v985 = vand.u32 %v153, 4294901760
      %986 = vmatprep.mubr.f32.mxu0 %v985
      %v987 = vand.u32 %v152, 4294901760
      %988 = vmatmul.mubr.f32.gmra.mrb[0].mxu0 %v987
      %v989 = vpop.f32.mrb[0].mxu0
      %v990 = vadd.f32 %v815, %v989
      %v991 = vpop.f32.mrb[0].mxu0
      %992 = vdwg.mxu0
      %993 = vmatprep.subr.mxu0 0.0
      %v994 = vand.u32 %v154, 4294901760
      %995 = vmatpush1.msra.mxu0 %v994
      %996 = vmatprep.subr.mxu0 0.0
      %v997 = vand.u32 %v155, 4294901760
      %998 = vmatpush1.msra.mxu0 %v997
      %999 = vmatprep.subr.mxu0 0.0
      %v1000 = vand.u32 %v156, 4294901760
      %1001 = vmatpush1.msra.mxu0 %v1000
      %1002 = vmatprep.subr.mxu0 0.0
      %v1003 = vand.u32 %v157, 4294901760
      %1004 = vmatpush1.msra.mxu0 %v1003
      %1005 = vmatprep.subr.mxu0 0.0
      %v1006 = vand.u32 %v158, 4294901760
      %1007 = vmatpush1.msra.mxu0 %v1006
      %1008 = vmatprep.subr.mxu0 0.0
      %v1009 = vand.u32 %v159, 4294901760
      %1010 = vmatpush1.msra.mxu0 %v1009
      %1011 = vmatprep.subr.mxu0 0.0
      %v1012 = vand.u32 %v160, 4294901760
      %1013 = vmatpush1.msra.mxu0 %v1012
      %1014 = vmatprep.subr.mxu0 0.0
      %v1015 = vand.u32 %v161, 4294901760
      %1016 = vmatpush1.msra.mxu0 %v1015
      %1017 = vmatprep.subr.mxu0 0.0
      %v1018 = vand.u32 %v162, 4294901760
      %1019 = vmatpush1.msra.mxu0 %v1018
      %1020 = vmatprep.subr.mxu0 0.0
      %v1021 = vand.u32 %v163, 4294901760
      %1022 = vmatpush1.msra.mxu0 %v1021
      %1023 = vmatprep.subr.mxu0 0.0
      %v1024 = vand.u32 %v164, 4294901760
      %1025 = vmatpush1.msra.mxu0 %v1024
      %1026 = vmatprep.subr.mxu0 0.0
      %v1027 = vand.u32 %v165, 4294901760
      %1028 = vmatpush1.msra.mxu0 %v1027
      %1029 = vmatprep.subr.mxu0 0.0
      %v1030 = vand.u32 %v166, 4294901760
      %1031 = vmatpush1.msra.mxu0 %v1030
      %1032 = vmatprep.subr.mxu0 0.0
      %v1033 = vand.u32 %v167, 4294901760
      %1034 = vmatpush1.msra.mxu0 %v1033
      %1035 = vmatprep.subr.mxu0 0.0
      %v1036 = vand.u32 %v168, 4294901760
      %1037 = vmatpush1.msra.mxu0 %v1036
      %1038 = vmatprep.subr.mxu0 0.0
      %v1039 = vand.u32 %v169, 4294901760
      %1040 = vmatpush1.msra.mxu0 %v1039
      %1041 = vmatprep.subr.mxu0 0.0
      %v1042 = vand.u32 %v170, 4294901760
      %1043 = vmatpush1.msra.mxu0 %v1042
      %1044 = vmatprep.subr.mxu0 0.0
      %v1045 = vand.u32 %v171, 4294901760
      %1046 = vmatpush1.msra.mxu0 %v1045
      %1047 = vmatprep.subr.mxu0 0.0
      %v1048 = vand.u32 %v172, 4294901760
      %1049 = vmatpush1.msra.mxu0 %v1048
      %1050 = vmatprep.subr.mxu0 0.0
      %v1051 = vand.u32 %v173, 4294901760
      %1052 = vmatpush1.msra.mxu0 %v1051
      %1053 = vmatprep.subr.mxu0 0.0
      %v1054 = vand.u32 %v174, 4294901760
      %1055 = vmatpush1.msra.mxu0 %v1054
      %1056 = vmatprep.subr.mxu0 0.0
      %v1057 = vand.u32 %v175, 4294901760
      %1058 = vmatpush1.msra.mxu0 %v1057
      %1059 = vmatprep.subr.mxu0 0.0
      %v1060 = vand.u32 %v176, 4294901760
      %1061 = vmatpush1.msra.mxu0 %v1060
      %1062 = vmatprep.subr.mxu0 0.0
      %v1063 = vand.u32 %v177, 4294901760
      %1064 = vmatpush1.msra.mxu0 %v1063
      %1065 = vmatprep.subr.mxu0 0.0
      %v1066 = vand.u32 %v178, 4294901760
      %1067 = vmatpush1.msra.mxu0 %v1066
      %1068 = vmatprep.subr.mxu0 0.0
      %v1069 = vand.u32 %v179, 4294901760
      %1070 = vmatpush1.msra.mxu0 %v1069
      %1071 = vmatprep.subr.mxu0 0.0
      %v1072 = vand.u32 %v180, 4294901760
      %1073 = vmatpush1.msra.mxu0 %v1072
      %1074 = vmatprep.subr.mxu0 0.0
      %v1075 = vand.u32 %v181, 4294901760
      %1076 = vmatpush1.msra.mxu0 %v1075
      %1077 = vmatprep.subr.mxu0 0.0
      %v1078 = vand.u32 %v182, 4294901760
      %1079 = vmatpush1.msra.mxu0 %v1078
      %1080 = vmatprep.subr.mxu0 0.0
      %v1081 = vand.u32 %v183, 4294901760
      %1082 = vmatpush1.msra.mxu0 %v1081
      %1083 = vmatprep.subr.mxu0 0.0
      %v1084 = vand.u32 %v184, 4294901760
      %1085 = vmatpush1.msra.mxu0 %v1084
      %1086 = vmatprep.subr.mxu0 0.0
      %v1087 = vand.u32 %v185, 4294901760
      %1088 = vmatpush1.msra.mxu0 %v1087
      %v1089 = vand.u32 %v151, 4294901760
      %1090 = vmatprep.mubr.f32.mxu0 %v1089
      %v1091 = vand.u32 %v150, 4294901760
      %1092 = vmatmul.mubr.f32.gmra.mrb[0].mxu0 %v1091
      %v1093 = vpop.f32.mrb[0].mxu0
      %v1094 = vadd.f32 %v983, %v1093
      %v1095 = vpop.f32.mrb[0].mxu0
      %v1096 = vand.u32 %v153, 4294901760
      %1097 = vmatprep.mubr.f32.mxu0 %v1096
      %v1098 = vand.u32 %v152, 4294901760
      %1099 = vmatmul.mubr.f32.gmra.mrb[0].mxu0 %v1098
      %v1100 = vpop.f32.mrb[0].mxu0
      %v1101 = vadd.f32 %v990, %v1100
      %v1102 = vpop.f32.mrb[0].mxu0
      %1103 = vdwg.mxu0
      %vm1104 = vcmask 31744
      %1105 = vst.msk [vmem:[%s148] sm:$0xff] %vm1104, %v1094
      %1106 = vst.msk [vmem:[%s148 + $0x8] sm:$0xff] %vm1104, %v1101
      %s1107 = smul.u32 2, %s13
      %p1108 = scmp.lt.s32.totalorder %s1107, 7
      %s1109 = scalar_select %p1108, %s1107, 7
      %s1110 = smul.addr %s1109, 8
      %s1111 = scalar_lea.vmem %s2, %s1110
      // Predicated region
      $region29: #{att_distribute_loss.1} parent=27 // pred_check
        %p1112 = pneg %p78
      $region30: #{att_distribute_loss.1} parent=27 // pred_check_branch
        %1114 = sbr.rel (%p1112) target = $region32
      $region31: #{att_distribute_loss.1} parent=27 // pred_region
        %s1115 = smul.u32 2, %s13
      $region32: #{att_distribute_loss.1} parent=27 // pred_fallthru
        _
    $region28: #{att_distribute_loss.1} parent=5 // pred_fallthru
      _
    %p1116 = scmp.le.s32.totalorder 2, %s8
    // Predicated region
    $region33: #{att_distribute_loss.1} parent=5 // pred_check
      %p1117 = pneg %p1116
    $region34: #{att_distribute_loss.1} parent=5 // pred_check_branch
      %1119 = sbr.rel (%p1117) target = $region36
    $region35: #{att_distribute_loss.1} parent=5 // pred_region
      %s1120 = ssub.s32 %s8, 2
      // Predicated region
      $region37: #{att_distribute_loss.1} parent=35 // pred_check
        %p1121 = pneg %p84
      $region38: #{att_distribute_loss.1} parent=35 // pred_check_branch
        %1123 = sbr.rel (%p1121) target = $region40
      $region39: #{att_distribute_loss.1} parent=35 // pred_region
        %s1124 = smul.u32 2, %s14
        %p1125 = scmp.lt.s32.totalorder %s1124, 7
        %s1126 = scalar_select %p1125, %s1124, 7
        %s1127 = smul.addr %s1126, 8
        %s1128 = scalar_lea.vmem %s2, %s1127
      $region40: #{att_distribute_loss.1} parent=35 // pred_fallthru
        _
    $region36: #{att_distribute_loss.1} parent=5 // pred_fallthru
      _
  $region6: #{att_distribute_loss.1} parent=0 // loop_footer
    %s12 = sadd.s32 1, %s8
  $region7: #{att_distribute_loss.1} parent=0 // loop_footer_branch
    %7 = sbr.rel target = $region3
  $region8: #{att_distribute_loss.1} parent=0 // loop_exit
    _

</llo_original>
